<compile_context>
chip_gen: v7x
topology: tpu7x:2x2x1
jax: 0.10.0
libtpu: 0.0.40
codegen_flags: <defaults>
</compile_context>

<pallas_src>
import math

import jax
import jax.numpy as jnp
from jax import lax
from jax.experimental import pallas as pl
from jax.experimental.pallas import tpu as pltpu


def _compute_vmem_limit():
    cap = 64 * 1024 * 1024  # conservative fallback (v7x physical)
    try:
        info = pltpu.get_tpu_info()
        cap = int(getattr(info, "vmem_capacity_bytes", cap) or cap)
    except Exception:
        pass
    return min((cap * 3) // 4, 112 * 1024 * 1024)


_VMEM_LIMIT = _compute_vmem_limit()


def _pick_tile(dim, candidates):
    """Largest candidate that evenly divides `dim`, else the full extent."""
    for c in candidates:
        if dim % c == 0:
            return c
    # TODO(synk): non-divisible dims fall back to one full-extent block; a
    # pl.cdiv grid with masked tail tiles would be more robust for huge dims.
    return dim


# ----------------------------------------------------------------------------
# Tiled linear:  y = x @ W_t + b   (W_t pre-transposed to (Din, Dout))
# ----------------------------------------------------------------------------
def _linear_kernel(x_ref, w_ref, b_ref, o_ref, acc_ref):
    k = pl.program_id(2)

    @pl.when(k == 0)
    def _init():
        acc_ref[...] = jnp.zeros_like(acc_ref)

    acc_ref[...] += jnp.dot(x_ref[...], w_ref[...],
                            preferred_element_type=jnp.float32)

    @pl.when(k == pl.num_programs(2) - 1)
    def _done():
        o_ref[...] = (acc_ref[...] + b_ref[...].astype(jnp.float32)).astype(o_ref.dtype)


def linear(x, w_t, b):
    """x: (B, S, Din), w_t: (Din, Dout), b: (Dout,) -> (B, S, Dout)."""
    B, S, Din = x.shape
    Dout = w_t.shape[1]
    M = B * S

    x2 = x.reshape(M, Din)
    b2 = b.reshape(1, Dout)

    tm = _pick_tile(M, (256, 128, 64, 32, 16, 8))
    tn = _pick_tile(Dout, (512, 256, 128))
    tk = _pick_tile(Din, (1024, 512, 256, 128))

    out = pl.pallas_call(
        _linear_kernel,
        out_shape=jax.ShapeDtypeStruct((M, Dout), x.dtype),
        grid=(M // tm, Dout // tn, Din // tk),
        in_specs=[
            pl.BlockSpec((tm, tk), lambda i, j, k: (i, k)),
            pl.BlockSpec((tk, tn), lambda i, j, k: (k, j)),
            pl.BlockSpec((1, tn), lambda i, j, k: (0, j)),
        ],
        out_specs=pl.BlockSpec((tm, tn), lambda i, j, k: (i, j)),
        scratch_shapes=[pltpu.VMEM((tm, tn), jnp.float32)],
        compiler_params=pltpu.CompilerParams(
            dimension_semantics=("parallel", "parallel", "arbitrary"),
            vmem_limit_bytes=_VMEM_LIMIT,
        ),
    )(x2, w_t, b2)
    return out.reshape(B, S, Dout)


# ----------------------------------------------------------------------------
# Attention kernels.  Q arrives already scaled by 1/sqrt(d_k) (folded into W_q).
# Layout stays (B, S, d_model); heads are looped in-kernel with per-head stores.
# ----------------------------------------------------------------------------
def _make_attn_weights_kernel(num_heads, d_k):
    """K/V resident per batch; also emits the full attention-weights block."""
    def kernel(q_ref, k_ref, v_ref, o_ref, aw_ref):
        q_all = q_ref[0]   # (tq, d_model)
        k_all = k_ref[0]   # (Sk, d_model)
        v_all = v_ref[0]   # (Sk, d_model)

        for h in range(num_heads):
            lo, hi = h * d_k, (h + 1) * d_k
            # QK^T without transposing K: contract the d_k axes directly.
            s = lax.dot_general(
                q_all[:, lo:hi], k_all[:, lo:hi],
                dimension_numbers=(((1,), (1,)), ((), ())),
                preferred_element_type=jnp.float32,
            )  # (tq, Sk) f32
            m = jnp.max(s, axis=-1, keepdims=True)
            e = jnp.exp(s - m)
            denom = jnp.sum(e, axis=-1, keepdims=True)
            r = pl.reciprocal(denom, approx=True)   # EUP vrcp (free slot)
            r = r * (2.0 - denom * r)               # one Newton step -> full f32
            attn = e * r
            # TODO(synk): Dropout(0.1) on attention weights -> identity (eval).
            aw_ref[0, h] = attn.astype(aw_ref.dtype)
            out_h = jnp.dot(attn.astype(v_all.dtype), v_all[:, lo:hi],
                            preferred_element_type=jnp.float32)
            # Per-head direct store: bounds liveness, no concat epilogue.
            o_ref[0, :, lo:hi] = out_h.astype(o_ref.dtype)

    return kernel


def _make_attn_flash_kernel(num_heads, d_k):
    """KV-tiled online-softmax kernel (no weights output); VMEM ~ O(tq*d_model)."""
    def kernel(q_ref, k_ref, v_ref, o_ref, m_sc, l_sc, acc_sc):
        kv = pl.program_id(2)

        @pl.when(kv == 0)
        def _init():
            m_sc[...] = jnp.full_like(m_sc, -jnp.inf)
            l_sc[...] = jnp.zeros_like(l_sc)
            acc_sc[...] = jnp.zeros_like(acc_sc)

        q_all = q_ref[0]   # (tq,  d_model)
        k_all = k_ref[0]   # (tkv, d_model)
        v_all = v_ref[0]   # (tkv, d_model)

        for h in range(num_heads):
            lo, hi = h * d_k, (h + 1) * d_k
            s = lax.dot_general(
                q_all[:, lo:hi], k_all[:, lo:hi],
                dimension_numbers=(((1,), (1,)), ((), ())),
                preferred_element_type=jnp.float32,
            )  # (tq, tkv) f32
            m_prev = m_sc[h]
            m_new = jnp.maximum(m_prev, jnp.max(s, axis=-1, keepdims=True))
            alpha = jnp.exp(m_prev - m_new)
            p = jnp.exp(s - m_new)
            l_sc[h] = alpha * l_sc[h] + jnp.sum(p, axis=-1, keepdims=True)
            acc_sc[:, lo:hi] = alpha * acc_sc[:, lo:hi] + jnp.dot(
                p.astype(v_all.dtype), v_all[:, lo:hi],
                preferred_element_type=jnp.float32)
            m_sc[h] = m_new

        @pl.when(kv == pl.num_programs(2) - 1)
        def _done():
            for h in range(num_heads):
                lo, hi = h * d_k, (h + 1) * d_k
                l_h = l_sc[h]
                r = pl.reciprocal(l_h, approx=True)
                r = r * (2.0 - l_h * r)
                o_ref[0, :, lo:hi] = (acc_sc[:, lo:hi] * r).astype(o_ref.dtype)

    return kernel


def multi_head_sdpa(q, k, v, d_model, num_heads, *,
                    q_block=0, k_block=0, v_block=0, return_weights=True):
    """q/k/v: (B, S, n*d_model); *_block selects the d_model-wide third when the
    fused QKV tensor is passed (no materialized split)."""
    B, Sq = q.shape[0], q.shape[1]
    Sk = k.shape[1]
    d_k = d_model // num_heads

    # Cap the q tile at 256: enough M for the MXU, keeps scores in the vreg file.
    tq = _pick_tile(Sq, (256, 128, 64, 32, 16, 8))
    num_q = Sq // tq

    if return_weights:
        kernel = _make_attn_weights_kernel(num_heads, d_k)
        out, aw = pl.pallas_call(
            kernel,
            out_shape=(
                jax.ShapeDtypeStruct((B, Sq, d_model), q.dtype),
                jax.ShapeDtypeStruct((B, num_heads, Sq, Sk), q.dtype),
            ),
            grid=(B, num_q),
            in_specs=[
                pl.BlockSpec((1, tq, d_model), lambda b, qi: (b, qi, q_block)),
                pl.BlockSpec((1, Sk, d_model), lambda b, qi: (b, 0, k_block)),
                pl.BlockSpec((1, Sk, d_model), lambda b, qi: (b, 0, v_block)),
            ],
            out_specs=(
                pl.BlockSpec((1, tq, d_model), lambda b, qi: (b, qi, 0)),
                pl.BlockSpec((1, num_heads, tq, Sk), lambda b, qi: (b, 0, qi, 0)),
            ),
            compiler_params=pltpu.CompilerParams(
                dimension_semantics=("parallel", "parallel"),
                vmem_limit_bytes=_VMEM_LIMIT,
            ),
        )(q, k, v)
        return out, aw

    # Fast path: flash-style KV tiling, no O(S^2) weights writeback.
    tkv = _pick_tile(Sk, (512, 256, 128, 64, 32, 16, 8))
    num_kv = Sk // tkv
    kernel = _make_attn_flash_kernel(num_heads, d_k)
    out = pl.pallas_call(
        kernel,
        out_shape=jax.ShapeDtypeStruct((B, Sq, d_model), q.dtype),
        grid=(B, num_q, num_kv),
        in_specs=[
            pl.BlockSpec((1, tq, d_model), lambda b, qi, kv: (b, qi, q_block)),
            pl.BlockSpec((1, tkv, d_model), lambda b, qi, kv: (b, kv, k_block)),
            pl.BlockSpec((1, tkv, d_model), lambda b, qi, kv: (b, kv, v_block)),
        ],
        out_specs=pl.BlockSpec((1, tq, d_model), lambda b, qi, kv: (b, qi, 0)),
        scratch_shapes=[
            pltpu.VMEM((num_heads, tq, 1), jnp.float32),   # running max
            pltpu.VMEM((num_heads, tq, 1), jnp.float32),   # running denom
            pltpu.VMEM((tq, d_model), jnp.float32),        # running output
        ],
        compiler_params=pltpu.CompilerParams(
            dimension_semantics=("parallel", "parallel", "arbitrary"),
            vmem_limit_bytes=_VMEM_LIMIT,
        ),
    )(q, k, v)
    return out, None


# ----------------------------------------------------------------------------
# Parameter prep (once) + full MultiHeadAttention forward
# ----------------------------------------------------------------------------
def prepare_params(raw, num_heads):
    """Pre-transpose weights to (Din, Dout), fold 1/sqrt(d_k) into W_q/b_q, and
    pre-concatenate the fused QKV projection.  Done once, not per forward."""
    d_model = raw["wq_w"].shape[0]
    d_k = d_model // num_heads
    scale = 1.0 / math.sqrt(d_k)
    wq = raw["wq_w"] * scale
    bq = raw["wq_b"] * scale
    return {
        "d_model": d_model,
        "num_heads": num_heads,
        "wq_t": jnp.asarray(wq.T), "bq": bq,
        "wk_t": jnp.asarray(raw["wk_w"].T), "bk": raw["wk_b"],
        "wv_t": jnp.asarray(raw["wv_w"].T), "bv": raw["wv_b"],
        "wo_t": jnp.asarray(raw["wo_w"].T), "bo": raw["wo_b"],
        "wqkv_t": jnp.concatenate([wq, raw["wk_w"], raw["wv_w"]], axis=0).T,
        "bqkv": jnp.concatenate([bq, raw["wk_b"], raw["wv_b"]], axis=0),
    }


def multi_head_attention(prepped, query, key, value, mask=None,
                         return_weights=True):
    if mask is not None:
        # TODO(synk): attention mask not implemented in the Pallas kernels.
        raise NotImplementedError("mask is not supported")

    d_model = prepped["d_model"]
    num_heads = prepped["num_heads"]

    if (query is key) and (key is value):
        # Self-attention: single fused QKV projection (activation read once,
        # 3x wider N for the MXU).  Scale already folded into the Q third.
        qkv = linear(query, prepped["wqkv_t"], prepped["bqkv"])
        if d_model % 128 == 0:
            # Lane-aligned: select Q/K/V via BlockSpec last-dim block offsets,
            # no materialized split through HBM.
            attn_out, attn_w = multi_head_sdpa(
                qkv, qkv, qkv, d_model, num_heads,
                q_block=0, k_block=1, v_block=2, return_weights=return_weights)
        else:
            q, k, v = jnp.split(qkv, 3, axis=-1)
            attn_out, attn_w = multi_head_sdpa(
                q, k, v, d_model, num_heads, return_weights=return_weights)
    else:
        q = linear(query, prepped["wq_t"], prepped["bq"])
        k = linear(key, prepped["wk_t"], prepped["bk"])
        v = linear(value, prepped["wv_t"], prepped["bv"])
        attn_out, attn_w = multi_head_sdpa(
            q, k, v, d_model, num_heads, return_weights=return_weights)

    # TODO(synk): for return_weights=False the W_o projection could be fused
    # into the attention epilogue to save one HBM round trip.
    out = linear(attn_out, prepped["wo_t"], prepped["bo"])
    return out, attn_w


# ----------------------------------------------------------------------------
# Pure-JAX reference for verification (uses the raw PyTorch-layout params)
# ----------------------------------------------------------------------------
def reference_mha(params, query, key, value, num_heads):
    B, S, d_model = query.shape
    d_k = d_model // num_heads

    def lin(x, w, b):
        return x @ w.T + b

    q = lin(query, params["wq_w"], params["wq_b"])
    k = lin(key, params["wk_w"], params["wk_b"])
    v = lin(value, params["wv_w"], params["wv_b"])

    def split(x):
        return x.reshape(B, S, num_heads, d_k).transpose(0, 2, 1, 3)

    qh, kh, vh = split(q), split(k), split(v)
    scores = jnp.einsum("bhqd,bhkd->bhqk", qh, kh) / math.sqrt(d_k)
    attn = jax.nn.softmax(scores, axis=-1)
    out = jnp.einsum("bhqk,bhkd->bhqd", attn, vh)
    out = out.transpose(0, 2, 1, 3).reshape(B, S, d_model)
    return lin(out, params["wo_w"], params["wo_b"]), attn


def init_params(key, d_model):
    ks = jax.random.split(key, 8)
    scale = 1.0 / math.sqrt(d_model)
    return {
        "wq_w": jax.random.normal(ks[0], (d_model, d_model), jnp.float32) * scale,
        "wq_b": jax.random.normal(ks[1], (d_model,), jnp.float32) * scale,
        "wk_w": jax.random.normal(ks[2], (d_model, d_model), jnp.float32) * scale,
        "wk_b": jax.random.normal(ks[3], (d_model,), jnp.float32) * scale,
        "wv_w": jax.random.normal(ks[4], (d_model, d_model), jnp.float32) * scale,
        "wv_b": jax.random.normal(ks[5], (d_model,), jnp.float32) * scale,
        "wo_w": jax.random.normal(ks[6], (d_model, d_model), jnp.float32) * scale,
        "wo_b": jax.random.normal(ks[7], (d_model,), jnp.float32) * scale,
    }


if __name__ == "__main__":
    B, S, d_model, num_heads = 2, 8, 128, 4

    root = jax.random.PRNGKey(0)
    kp, kq, kk, kv = jax.random.split(root, 4)
    raw_params = init_params(kp, d_model)
    prepped = prepare_params(raw_params, num_heads)

    query = jax.random.normal(kq, (B, S, d_model), jnp.float32)
    key_in = jax.random.normal(kk, (B, S, d_model), jnp.float32)
    value = jax.random.normal(kv, (B, S, d_model), jnp.float32)

    # 1) Cross-attention with weights (separate projections, weights kernel).
    out, attn_w = multi_head_attention(prepped, query, key_in, value)
    out = jax.block_until_ready(out)
    attn_w = jax.block_until_ready(attn_w)
    ref_out, ref_attn = reference_mha(raw_params, query, key_in, value, num_heads)
    assert out.shape == (B, S, d_model)
    assert attn_w.shape == (B, num_heads, S, S)
    assert jnp.allclose(out, ref_out, atol=1e-4, rtol=1e-4)
    assert jnp.allclose(attn_w, ref_attn, atol=1e-4, rtol=1e-4)

    # 2) Self-attention with weights (fused QKV projection, no split copy).
    out_sa, aw_sa = multi_head_attention(prepped, query, query, query)
    out_sa = jax.block_until_ready(out_sa)
    ref_sa, ref_aw_sa = reference_mha(raw_params, query, query, query, num_heads)
    assert jnp.allclose(out_sa, ref_sa, atol=1e-4, rtol=1e-4)
    assert jnp.allclose(aw_sa, ref_aw_sa, atol=1e-4, rtol=1e-4)

    # 3) Fast path (no weights): KV-tiled flash kernel, cross and self.
    out_nw, aw_nw = multi_head_attention(prepped, query, key_in, value,
                                         return_weights=False)
    out_nw = jax.block_until_ready(out_nw)
    assert aw_nw is None
    assert jnp.allclose(out_nw, ref_out, atol=1e-4, rtol=1e-4)

    out_sanw, _ = multi_head_attention(prepped, query, query, query,
                                       return_weights=False)
    out_sanw = jax.block_until_ready(out_sanw)
    assert jnp.allclose(out_sanw, ref_sa, atol=1e-4, rtol=1e-4)

    print("KERNEL_OK")
</pallas_src>

<mosaic_0001>
module attributes {stable_mosaic.version = 11 : i64} {
  func.func @_linear_kernel(%arg0: i32, %arg1: i32, %arg2: i32, %arg3: memref<16x128xf32, #tpu.memory_space<vmem>>, %arg4: memref<128x128xf32, #tpu.memory_space<vmem>>, %arg5: memref<1x128xf32, #tpu.memory_space<vmem>>, %arg6: memref<16x128xf32, #tpu.memory_space<vmem>>, %arg7: memref<16x128xf32, #tpu.memory_space<vmem>>) attributes {dimension_semantics = [#tpu.dimension_semantics<parallel>, #tpu.dimension_semantics<parallel>, #tpu.dimension_semantics<arbitrary>], iteration_bounds = array<i64: 1, 1, 1>, scalar_prefetch = 0 : i64, scratch_operands = 1 : i64, tpu.core_type = #tpu.core_type<tc>, window_params = [{transform_indices = @transform_0, window_bounds = array<i64: 16, 128>}, {transform_indices = @transform_1, window_bounds = array<i64: 128, 128>}, {transform_indices = @transform_2, window_bounds = array<i64: 1, 128>}, {transform_indices = @transform_3, window_bounds = array<i64: 16, 128>}]} {
    %c0_i32 = arith.constant 0 : i32
    %0 = arith.cmpi eq, %arg2, %c0_i32 : i32
    %1 = arith.extui %0 : i1 to i32
    %c0_i32_0 = arith.constant 0 : i32
    %2 = arith.cmpi ne, %1, %c0_i32_0 : i32
    scf.if %2 {
      %cst_10 = arith.constant 0.000000e+00 : f32
      %12 = vector.broadcast %cst_10 : f32 to vector<16x128xf32>
      %c0_11 = arith.constant 0 : index
      %c0_12 = arith.constant 0 : index
      %13 = vector.load %arg7[%c0_11, %c0_12] : memref<16x128xf32, #tpu.memory_space<vmem>>, vector<16x128xf32>
      tpu.vector_store %arg7[%c0_11, %c0_12], %12 {strides = array<i32>} : memref<16x128xf32, #tpu.memory_space<vmem>>, vector<16x128xf32>,
    } else {
    }
    %c0 = arith.constant 0 : index
    %c0_1 = arith.constant 0 : index
    %3 = vector.load %arg7[%c0, %c0_1] : memref<16x128xf32, #tpu.memory_space<vmem>>, vector<16x128xf32>
    %c0_2 = arith.constant 0 : index
    %c0_3 = arith.constant 0 : index
    %4 = vector.load %arg3[%c0_2, %c0_3] : memref<16x128xf32, #tpu.memory_space<vmem>>, vector<16x128xf32>
    %c0_4 = arith.constant 0 : index
    %c0_5 = arith.constant 0 : index
    %5 = vector.load %arg4[%c0_4, %c0_5] : memref<128x128xf32, #tpu.memory_space<vmem>>, vector<128x128xf32>
    %cst = arith.constant dense<0.000000e+00> : vector<16x128xf32>
    %6 = tpu.matmul %4, %5, %cst {dimension_numbers = #tpu.dot_dimension_numbers<[1], [0], [0], [1], [0, 0, 1, 1], [], []>} : vector<16x128xf32>, vector<128x128xf32>, vector<16x128xf32> -> vector<16x128xf32>
    %7 = arith.addf %3, %6 : vector<16x128xf32>
    %c0_6 = arith.constant 0 : index
    %c0_7 = arith.constant 0 : index
    %8 = vector.load %arg7[%c0_6, %c0_7] : memref<16x128xf32, #tpu.memory_space<vmem>>, vector<16x128xf32>
    tpu.vector_store %arg7[%c0_6, %c0_7], %7 {strides = array<i32>} : memref<16x128xf32, #tpu.memory_space<vmem>>, vector<16x128xf32>,
    %c0_i32_8 = arith.constant 0 : i32
    %9 = arith.cmpi eq, %arg2, %c0_i32_8 : i32
    %10 = arith.extui %9 : i1 to i32
    %c0_i32_9 = arith.constant 0 : i32
    %11 = arith.cmpi ne, %10, %c0_i32_9 : i32
    scf.if %11 {
      %c0_10 = arith.constant 0 : index
      %c0_11 = arith.constant 0 : index
      %12 = vector.load %arg7[%c0_10, %c0_11] : memref<16x128xf32, #tpu.memory_space<vmem>>, vector<16x128xf32>
      %c0_12 = arith.constant 0 : index
      %c0_13 = arith.constant 0 : index
      %13 = vector.load %arg5[%c0_12, %c0_13] : memref<1x128xf32, #tpu.memory_space<vmem>>, vector<1x128xf32>
      %14 = vector.broadcast %13 : vector<1x128xf32> to vector<16x128xf32>
      %15 = arith.addf %12, %14 : vector<16x128xf32>
      %c0_14 = arith.constant 0 : index
      %c0_15 = arith.constant 0 : index
      %16 = vector.load %arg6[%c0_14, %c0_15] : memref<16x128xf32, #tpu.memory_space<vmem>>, vector<16x128xf32>
      tpu.vector_store %arg6[%c0_14, %c0_15], %15 {strides = array<i32>} : memref<16x128xf32, #tpu.memory_space<vmem>>, vector<16x128xf32>,
    } else {
    }
    return
  }
  func.func @transform_0(%arg0: i32, %arg1: i32, %arg2: i32) -> (i32, i32) {
    %c0_i32 = arith.constant 0 : i32
    return %arg0, %arg2 : i32, i32
  }
  func.func @transform_1(%arg0: i32, %arg1: i32, %arg2: i32) -> (i32, i32) {
    %c0_i32 = arith.constant 0 : i32
    return %arg2, %arg1 : i32, i32
  }
  func.func @transform_2(%arg0: i32, %arg1: i32, %arg2: i32) -> (i32, i32) {
    %c0_i32 = arith.constant 0 : i32
    %c0_i32_0 = arith.constant 0 : i32
    return %c0_i32, %arg1 : i32, i32
  }
  func.func @transform_3(%arg0: i32, %arg1: i32, %arg2: i32) -> (i32, i32) {
    %c0_i32 = arith.constant 0 : i32
    return %arg0, %arg1 : i32, i32
  }
}

</mosaic_0001>

<llo_original>
// kernel: tpu_custom_call.1
$region0: #{tpu_custom_call.1}
  #allocation0 [shape = 'u32[]', space=smem, size = 0x4, offset = 0x4, fixed_abs, tag = 'smem constant byte address 0x4 - core index']
  #allocation1 [shape = 'u32[144,128]{1,0:T(1,128)}', space=vmem, size = 0x12000, scoped, tag = 'internal scratch']
  #allocation2 [shape = 'f32[16,128]{1,0:T(8,128)}', space=vmem, size = 0x2000, scoped, tag = 'scratch operand']
  %s0 = inlined_call_operand.hbm [shape: f32[16,128], index: 0, kind: input, shape index: {}]
  %s1 = inlined_call_operand.hbm [shape: f32[128,128], index: 1, kind: input, shape index: {}]
  %s2 = inlined_call_operand.vmem [shape: f32[1,128], index: 2, kind: input, shape index: {}]
  %s3 = inlined_call_operand.hbm [shape: f32[16,128], index: 3, kind: output, shape index: {}]
  %s4 = sld [smem:[#allocation0]]
  $region38: #{tpu_custom_call.1} parent=0
    _
  %s6 = ssub.s32 1, %s4
  %s7 = scalar_select 0, %s6, %s4
  $region1: #{tpu_custom_call.1} parent=0
    #allocation3 [shape = 'u8[8192]{0}', space=vmem, size = 0x2000, scoped, tag = 'input window, operand 0, single buffered']
    #allocation4 [shape = 's32[1]{0}', space=sflag, size = 0x4, scoped, tag = 'scoped memory for tpu_custom_call.1']
    #allocation5 [shape = 's32[1]{0}', space=sflag, size = 0x4, scoped, tag = 'scoped memory for tpu_custom_call.1']
    #allocation6 [shape = 'u8[65536]{0}', space=vmem, size = 0x10000, scoped, tag = 'input window, operand 1, single buffered']
    #allocation7 [shape = 's32[1]{0}', space=sflag, size = 0x4, scoped, tag = 'scoped memory for tpu_custom_call.1']
    #allocation8 [shape = 'u8[8192]{0}', space=vmem, size = 0x2000, scoped, tag = 'output window, operand 0, single buffered']
    %8 = vsyncpa [#allocation4], 0
    %9 = vsyncpa [#allocation7], 0
    %10 = vsyncpa [#allocation5], 0
    // Predicated region
    $region2: #{tpu_custom_call.1} parent=1 // pred_check
      _
    $region3: #{tpu_custom_call.1} parent=1 // pred_check_branch
      %12 = sbr.rel (0) target = $region5
    $region4: #{tpu_custom_call.1} parent=1 // pred_region
      %s14 = ssub.s32 256, 256
      %15 = vsyncadd [#allocation4], %s14
      %s16 = sshll.u32 [#allocation3], 4
      %s17 = int_to_ptr.vmem [resolvable:$true] %s16
      %22 = dma.hbm_to_vmem [thread:$0]  %s0, 256, %s17, [#allocation4], 128, 128, 8
    $region5: #{tpu_custom_call.1} parent=1 // pred_fallthru
      _
    // Predicated region
    $region6: #{tpu_custom_call.1} parent=1 // pred_check
      _
    $region7: #{tpu_custom_call.1} parent=1 // pred_check_branch
      %24 = sbr.rel (0) target = $region9
    $region8: #{tpu_custom_call.1} parent=1 // pred_region
      %s26 = ssub.s32 2048, 2048
      %27 = vsyncadd [#allocation7], %s26
      %s28 = sshll.u32 [#allocation6], 4
      %s29 = int_to_ptr.vmem [resolvable:$true] %s28
      %34 = dma.hbm_to_vmem [thread:$0]  %s1, 2048, %s29, [#allocation7], 128, 128, 8
    $region9: #{tpu_custom_call.1} parent=1 // pred_fallthru
      _
    // Predicated region
    $region10: #{tpu_custom_call.1} parent=1 // pred_check
      _
    $region11: #{tpu_custom_call.1} parent=1 // pred_check_branch
      %36 = sbr.rel (0) target = $region13
    $region12: #{tpu_custom_call.1} parent=1 // pred_region
      _
    $region13: #{tpu_custom_call.1} parent=1 // pred_fallthru
      _
    // Predicated region
    $region14: #{tpu_custom_call.1} parent=1 // pred_check
      _
    $region15: #{tpu_custom_call.1} parent=1 // pred_check_branch
      %38 = sbr.rel (0) target = $region17
    $region16: #{tpu_custom_call.1} parent=1 // pred_region
      %39 = dma.done [#allocation4], 256
    $region17: #{tpu_custom_call.1} parent=1 // pred_fallthru
      _
    // Predicated region
    $region18: #{tpu_custom_call.1} parent=1 // pred_check
      _
    $region19: #{tpu_custom_call.1} parent=1 // pred_check_branch
      %41 = sbr.rel (0) target = $region21
    $region20: #{tpu_custom_call.1} parent=1 // pred_region
      %42 = dma.done [#allocation7], 2048
    $region21: #{tpu_custom_call.1} parent=1 // pred_fallthru
      _
    %p43 = scmp.eq.s32.totalorder 0, 0
    // Predicated region
    $region22: #{tpu_custom_call.1} parent=1 // pred_check
      %p44 = pneg %p43
    $region23: #{tpu_custom_call.1} parent=1 // pred_check_branch
      %46 = sbr.rel (%p44) target = $region25
    $region24: #{tpu_custom_call.1} parent=1 // pred_region
      %47 = vst [vmem:[#allocation2] sm:$0xff] 0.0
      %48 = vst [vmem:[#allocation2 + $0x8] sm:$0xff] 0.0
    $region25: #{tpu_custom_call.1} parent=1 // pred_fallthru
      _
    %v49 = vld [vmem:[#allocation2] sm:$0xff]
    %v50 = vld [vmem:[#allocation2 + $0x8] sm:$0xff]
    %v51 = vld [vmem:[#allocation3] sm:$0xff]
    %v52 = vld [vmem:[#allocation3 + $0x8] sm:$0xff]
    %v53 = vld [vmem:[#allocation6] sm:$0xff]
    %v54 = vld [vmem:[#allocation6 + $0x8] sm:$0xff]
    %v55 = vld [vmem:[#allocation6 + $0x10] sm:$0xff]
    %v56 = vld [vmem:[#allocation6 + $0x18] sm:$0xff]
    %v57 = vld [vmem:[#allocation6 + $0x20] sm:$0xff]
    %v58 = vld [vmem:[#allocation6 + $0x28] sm:$0xff]
    %v59 = vld [vmem:[#allocation6 + $0x30] sm:$0xff]
    %v60 = vld [vmem:[#allocation6 + $0x38] sm:$0xff]
    %v61 = vld [vmem:[#allocation6 + $0x40] sm:$0xff]
    %v62 = vld [vmem:[#allocation6 + $0x48] sm:$0xff]
    %v63 = vld [vmem:[#allocation6 + $0x50] sm:$0xff]
    %v64 = vld [vmem:[#allocation6 + $0x58] sm:$0xff]
    %v65 = vld [vmem:[#allocation6 + $0x60] sm:$0xff]
    %v66 = vld [vmem:[#allocation6 + $0x68] sm:$0xff]
    %v67 = vld [vmem:[#allocation6 + $0x70] sm:$0xff]
    %v68 = vld [vmem:[#allocation6 + $0x78] sm:$0xff]
    %69 = vmatprep.subr.mxu0 0.0
    %70 = vmatpush1.msra.mxu0 %v53
    %71 = vmatprep.subr.mxu0 0.0
    %72 = vmatpush1.msra.mxu0 %v54
    %73 = vmatprep.subr.mxu0 0.0
    %74 = vmatpush1.msra.mxu0 %v55
    %75 = vmatprep.subr.mxu0 0.0
    %76 = vmatpush1.msra.mxu0 %v56
    %77 = vmatprep.subr.mxu0 0.0
    %78 = vmatpush1.msra.mxu0 %v57
    %79 = vmatprep.subr.mxu0 0.0
    %80 = vmatpush1.msra.mxu0 %v58
    %81 = vmatprep.subr.mxu0 0.0
    %82 = vmatpush1.msra.mxu0 %v59
    %83 = vmatprep.subr.mxu0 0.0
    %84 = vmatpush1.msra.mxu0 %v60
    %85 = vmatprep.subr.mxu0 0.0
    %86 = vmatpush1.msra.mxu0 %v61
    %87 = vmatprep.subr.mxu0 0.0
    %88 = vmatpush1.msra.mxu0 %v62
    %89 = vmatprep.subr.mxu0 0.0
    %90 = vmatpush1.msra.mxu0 %v63
    %91 = vmatprep.subr.mxu0 0.0
    %92 = vmatpush1.msra.mxu0 %v64
    %93 = vmatprep.subr.mxu0 0.0
    %94 = vmatpush1.msra.mxu0 %v65
    %95 = vmatprep.subr.mxu0 0.0
    %96 = vmatpush1.msra.mxu0 %v66
    %97 = vmatprep.subr.mxu0 0.0
    %98 = vmatpush1.msra.mxu0 %v67
    %99 = vmatprep.subr.mxu0 0.0
    %100 = vmatpush1.msra.mxu0 %v68
    %101 = vmatprep.subr.mxu0 0.0
    %102 = vmatpush1.msra.mxu0 0.0
    %103 = vmatprep.subr.mxu0 0.0
    %104 = vmatpush1.msra.mxu0 0.0
    %105 = vmatprep.subr.mxu0 0.0
    %106 = vmatpush1.msra.mxu0 0.0
    %107 = vmatprep.subr.mxu0 0.0
    %108 = vmatpush1.msra.mxu0 0.0
    %109 = vmatprep.subr.mxu0 0.0
    %110 = vmatpush1.msra.mxu0 0.0
    %111 = vmatprep.subr.mxu0 0.0
    %112 = vmatpush1.msra.mxu0 0.0
    %113 = vmatprep.subr.mxu0 0.0
    %114 = vmatpush1.msra.mxu0 0.0
    %115 = vmatprep.subr.mxu0 0.0
    %116 = vmatpush1.msra.mxu0 0.0
    %117 = vmatprep.subr.mxu0 0.0
    %118 = vmatpush1.msra.mxu0 0.0
    %119 = vmatprep.subr.mxu0 0.0
    %120 = vmatpush1.msra.mxu0 0.0
    %121 = vmatprep.subr.mxu0 0.0
    %122 = vmatpush1.msra.mxu0 0.0
    %123 = vmatprep.subr.mxu0 0.0
    %124 = vmatpush1.msra.mxu0 0.0
    %125 = vmatprep.subr.mxu0 0.0
    %126 = vmatpush1.msra.mxu0 0.0
    %127 = vmatprep.subr.mxu0 0.0
    %128 = vmatpush1.msra.mxu0 0.0
    %129 = vmatprep.subr.mxu0 0.0
    %130 = vmatpush1.msra.mxu0 0.0
    %131 = vmatprep.subr.mxu0 0.0
    %132 = vmatpush1.msra.mxu0 0.0
    %133 = vmatprep.mubr.f32.mxu0 0.0
    %134 = vmatmul.mubr.f32.gmra.mrb[0].mxu0 %v51
    %v135 = vpop.f32.mrb[0].mxu0
    %v136 = vadd.f32 0.0, %v135
    %v137 = vpop.f32.mrb[0].mxu0
    %138 = vmatprep.mubr.f32.mxu0 0.0
    %139 = vmatmul.mubr.f32.gmra.mrb[0].mxu0 %v52
    %v140 = vpop.f32.mrb[0].mxu0
    %v141 = vadd.f32 0.0, %v140
    %v142 = vpop.f32.mrb[0].mxu0
    %143 = vdwg.mxu0
    %v144 = vadd.f32 %v49, %v136
    %v145 = vadd.f32 %v50, %v141
    %146 = vst [vmem:[#allocation2] sm:$0xff] %v144
    %147 = vst [vmem:[#allocation2 + $0x8] sm:$0xff] %v145
    // Predicated region
    $region26: #{tpu_custom_call.1} parent=1 // pred_check
      %p148 = pneg %p43
    $region27: #{tpu_custom_call.1} parent=1 // pred_check_branch
      %150 = sbr.rel (%p148) target = $region29
    $region28: #{tpu_custom_call.1} parent=1 // pred_region
      %v151 = vld [vmem:[#allocation2] sm:$0xff]
      %v152 = vld [vmem:[#allocation2 + $0x8] sm:$0xff]
      %v153 = vld [vmem:[%s2] sm:$0x1]
      %v155 = vlaneseq
      %v156 = vshrl.u32 %v155, 7
      %v157 = vsub.s32 0, %v156
      %v158 = vrot.slane %v153, %v157
      %v160 = vadd.f32 %v151, %v158
      %v161 = vadd.f32 %v152, %v158
      %162 = vst [vmem:[#allocation8] sm:$0xff] %v160
      %163 = vst [vmem:[#allocation8 + $0x8] sm:$0xff] %v161
    $region29: #{tpu_custom_call.1} parent=1 // pred_fallthru
      _
    // Predicated region
    $region30: #{tpu_custom_call.1} parent=1 // pred_check
      _
    $region31: #{tpu_custom_call.1} parent=1 // pred_check_branch
      %165 = sbr.rel (0) target = $region33
    $region32: #{tpu_custom_call.1} parent=1 // pred_region
      %s167 = ssub.s32 256, 256
      %168 = vsyncadd [#allocation5], %s167
      %s169 = sshll.u32 [#allocation8], 4
      %s170 = int_to_ptr.vmem [resolvable:$true] %s169
      %175 = dma.vmem_to_hbm [thread:$0]  %s170, 256, %s3, [#allocation5], 128, 128, 8
    $region33: #{tpu_custom_call.1} parent=1 // pred_fallthru
      _
    // Predicated region
    $region34: #{tpu_custom_call.1} parent=1 // pred_check
      _
    $region35: #{tpu_custom_call.1} parent=1 // pred_check_branch
      %177 = sbr.rel (0) target = $region37
    $region36: #{tpu_custom_call.1} parent=1 // pred_region
      %178 = dma.done [#allocation5], 256
    $region37: #{tpu_custom_call.1} parent=1 // pred_fallthru
      _
    %179 = vsyncpa [#allocation4], 1
    %180 = vsyncpa [#allocation7], 1
    %181 = vsyncpa [#allocation5], 1

</llo_original>
